<compile_context>
chip_gen: v5e
topology: v5e:2x2
jax: 0.10.0
libtpu: 0.0.40
codegen_flags: <defaults>
</compile_context>

<pallas_src>
import functools

import jax
import jax.numpy as jnp
from jax.experimental import pallas as pl
from jax.experimental.pallas import tpu as pltpu


def _round_up(x, m):
    return ((x + m - 1) // m) * m


def mlp_kernel(x_ref, w1_ref, b1_ref, w2_ref, b2_ref, w3_ref, b3_ref, o_ref):
    # fc1 + bias + relu (f32 accumulate)
    h1 = jnp.dot(x_ref[...], w1_ref[...], preferred_element_type=jnp.float32)
    h1 = jnp.maximum(h1 + b1_ref[...], 0.0)
    # fc2 + bias + relu (tiny)
    h2 = jnp.dot(h1, w2_ref[...], preferred_element_type=jnp.float32)
    h2 = jnp.maximum(h2 + b2_ref[...], 0.0)
    # fc3 -> logits (TB, 10)
    logits = jnp.dot(h2, w3_ref[...], preferred_element_type=jnp.float32)
    logits = logits + b3_ref[...]
    # numerically stable log_softmax over the 10 class lanes
    m = jnp.max(logits, axis=1, keepdims=True)
    shifted = logits - m
    lse = jnp.log(jnp.sum(jnp.exp(shifted), axis=1, keepdims=True))
    o_ref[...] = (shifted - lse).astype(o_ref.dtype)


@functools.partial(jax.jit, static_argnames=("block_b",))
def mlp_forward(x, w1, b1, w2, b2, w3, b3, *, block_b=4096):
    B, K = x.shape                 # K = 784
    H1 = w1.shape[1]               # 16
    H2 = w2.shape[1]               # 16
    N = w3.shape[1]                # 10

    # Batch tile: multiple of 8 (f32 sublanes) or the full batch dim; keep it
    # <= B (no oversize blocks), <= block_b, and split into >=2 tiles when
    # possible so both v7x TensorCores get work.
    if B <= 8:
        TB = B                                            # full dim -> legal block
    else:
        TB = min(block_b, _round_up(pl.cdiv(B, 2), 8))
        TB = min(TB, (B // 8) * 8)

    grid = (pl.cdiv(B, TB),)

    flops = 2 * B * (K * H1 + H1 * H2 + H2 * N)
    transcendentals = B * (N + 1)          # exp per class + log per row
    bytes_accessed = (
        B * K * 4                          # x read (f32, unpadded)
        + B * N * 4                        # compact output write
        + (K * H1 + H1 * H2 + H2 * N + H1 + H2 + N) * 4
    )

    out = pl.pallas_call(
        mlp_kernel,
        out_shape=jax.ShapeDtypeStruct((B, N), jnp.float32),
        grid=grid,
        in_specs=[
            pl.BlockSpec((TB, K), lambda i: (i, 0)),   # x tile, pipelined over batch
            pl.BlockSpec((K, H1), lambda i: (0, 0)),   # w1 (resident across grid)
            pl.BlockSpec((1, H1), lambda i: (0, 0)),   # b1
            pl.BlockSpec((H1, H2), lambda i: (0, 0)),  # w2
            pl.BlockSpec((1, H2), lambda i: (0, 0)),   # b2
            pl.BlockSpec((H2, N), lambda i: (0, 0)),   # w3
            pl.BlockSpec((1, N), lambda i: (0, 0)),    # b3
        ],
        out_specs=pl.BlockSpec((TB, N), lambda i: (i, 0)),
        compiler_params=pltpu.CompilerParams(
            dimension_semantics=("parallel",),
            vmem_limit_bytes=56 * 1024 * 1024,   # safe on v7x (64 MiB/TC), ample on v5e/v6e
        ),
        cost_estimate=pl.CostEstimate(
            flops=flops,
            transcendentals=transcendentals,
            bytes_accessed=bytes_accessed,
        ),
    )(x, w1, b1, w2, b2, w3, b3)

    return out


def init_params(key):
    # Mimics PyTorch nn.Linear default init: U(-1/sqrt(fan_in), +1/sqrt(fan_in)).
    def linear_init(k, fan_in, fan_out):
        kw, kb = jax.random.split(k)
        bound = 1.0 / jnp.sqrt(fan_in)
        w = jax.random.uniform(kw, (fan_in, fan_out), jnp.float32, -bound, bound)
        b = jax.random.uniform(kb, (1, fan_out), jnp.float32, -bound, bound)
        return w, b

    k1, k2, k3 = jax.random.split(key, 3)
    w1, b1 = linear_init(k1, 28 * 28, 16)
    w2, b2 = linear_init(k2, 16, 16)
    w3, b3 = linear_init(k3, 16, 10)
    return w1, b1, w2, b2, w3, b3


if __name__ == "__main__":
    key = jax.random.PRNGKey(0)
    k_x, k_p = jax.random.split(key)

    B = 8
    x = jax.random.normal(k_x, (B, 28 * 28), dtype=jnp.float32)
    w1, b1, w2, b2, w3, b3 = init_params(k_p)

    out = mlp_forward(x, w1, b1, w2, b2, w3, b3)
    out = jax.block_until_ready(out)

    # Pure-JAX f32 reference (tolerance covers possible MXU bf16-pass matmul precision).
    h1 = jnp.maximum(x @ w1 + b1, 0.0)
    h2 = jnp.maximum(h1 @ w2 + b2, 0.0)
    logits = h2 @ w3 + b3
    ref = jax.nn.log_softmax(logits, axis=1)

    assert out.shape == (B, 10)
    assert jnp.all(jnp.isfinite(out))
    assert jnp.allclose(out, ref, atol=2e-2, rtol=2e-2), float(jnp.max(jnp.abs(out - ref)))

    print("KERNEL_OK")
</pallas_src>

<mosaic_0001>
module attributes {stable_mosaic.version = 11 : i64} {
  func.func @mlp_kernel(%arg0: i32, %arg1: memref<8x784xf32, #tpu.memory_space<vmem>>, %arg2: memref<784x16xf32, #tpu.memory_space<vmem>>, %arg3: memref<1x16xf32, #tpu.memory_space<vmem>>, %arg4: memref<16x16xf32, #tpu.memory_space<vmem>>, %arg5: memref<1x16xf32, #tpu.memory_space<vmem>>, %arg6: memref<16x10xf32, #tpu.memory_space<vmem>>, %arg7: memref<1x10xf32, #tpu.memory_space<vmem>>, %arg8: memref<8x10xf32, #tpu.memory_space<vmem>>) attributes {dimension_semantics = [#tpu.dimension_semantics<parallel>], iteration_bounds = array<i64: 1>, scalar_prefetch = 0 : i64, scratch_operands = 0 : i64, tpu.core_type = #tpu.core_type<tc>, window_params = [{transform_indices = @transform_0, window_bounds = array<i64: 8, 784>}, {pipeline_mode = #tpu.pipeline_mode<synchronous>, transform_indices = @transform_1, window_bounds = array<i64: 784, 16>}, {pipeline_mode = #tpu.pipeline_mode<synchronous>, transform_indices = @transform_2, window_bounds = array<i64: 1, 16>}, {pipeline_mode = #tpu.pipeline_mode<synchronous>, transform_indices = @transform_3, window_bounds = array<i64: 16, 16>}, {pipeline_mode = #tpu.pipeline_mode<synchronous>, transform_indices = @transform_4, window_bounds = array<i64: 1, 16>}, {pipeline_mode = #tpu.pipeline_mode<synchronous>, transform_indices = @transform_5, window_bounds = array<i64: 16, 10>}, {pipeline_mode = #tpu.pipeline_mode<synchronous>, transform_indices = @transform_6, window_bounds = array<i64: 1, 10>}, {transform_indices = @transform_7, window_bounds = array<i64: 8, 10>}]} {
    %c0 = arith.constant 0 : index
    %c0_0 = arith.constant 0 : index
    %0 = vector.load %arg1[%c0, %c0_0] : memref<8x784xf32, #tpu.memory_space<vmem>>, vector<8x784xf32>
    %c0_1 = arith.constant 0 : index
    %c0_2 = arith.constant 0 : index
    %1 = vector.load %arg2[%c0_1, %c0_2] : memref<784x16xf32, #tpu.memory_space<vmem>>, vector<784x16xf32>
    %cst = arith.constant dense<0.000000e+00> : vector<8x16xf32>
    %2 = tpu.matmul %0, %1, %cst {dimension_numbers = #tpu.dot_dimension_numbers<[1], [0], [0], [1], [0, 0, 1, 1], [], []>} : vector<8x784xf32>, vector<784x16xf32>, vector<8x16xf32> -> vector<8x16xf32>
    %c0_3 = arith.constant 0 : index
    %c0_4 = arith.constant 0 : index
    %3 = vector.load %arg3[%c0_3, %c0_4] : memref<1x16xf32, #tpu.memory_space<vmem>>, vector<1x16xf32>
    %4 = vector.broadcast %3 : vector<1x16xf32> to vector<8x16xf32>
    %5 = arith.addf %2, %4 : vector<8x16xf32>
    %cst_5 = arith.constant 0.000000e+00 : f32
    %6 = vector.broadcast %cst_5 : f32 to vector<8x16xf32>
    %7 = arith.maximumf %5, %6 : vector<8x16xf32>
    %c0_6 = arith.constant 0 : index
    %c0_7 = arith.constant 0 : index
    %8 = vector.load %arg4[%c0_6, %c0_7] : memref<16x16xf32, #tpu.memory_space<vmem>>, vector<16x16xf32>
    %cst_8 = arith.constant dense<0.000000e+00> : vector<8x16xf32>
    %9 = tpu.matmul %7, %8, %cst_8 {dimension_numbers = #tpu.dot_dimension_numbers<[1], [0], [0], [1], [0, 0, 1, 1], [], []>} : vector<8x16xf32>, vector<16x16xf32>, vector<8x16xf32> -> vector<8x16xf32>
    %c0_9 = arith.constant 0 : index
    %c0_10 = arith.constant 0 : index
    %10 = vector.load %arg5[%c0_9, %c0_10] : memref<1x16xf32, #tpu.memory_space<vmem>>, vector<1x16xf32>
    %11 = vector.broadcast %10 : vector<1x16xf32> to vector<8x16xf32>
    %12 = arith.addf %9, %11 : vector<8x16xf32>
    %cst_11 = arith.constant 0.000000e+00 : f32
    %13 = vector.broadcast %cst_11 : f32 to vector<8x16xf32>
    %14 = arith.maximumf %12, %13 : vector<8x16xf32>
    %c0_12 = arith.constant 0 : index
    %c0_13 = arith.constant 0 : index
    %15 = vector.load %arg6[%c0_12, %c0_13] : memref<16x10xf32, #tpu.memory_space<vmem>>, vector<16x10xf32>
    %cst_14 = arith.constant dense<0.000000e+00> : vector<8x10xf32>
    %16 = tpu.matmul %14, %15, %cst_14 {dimension_numbers = #tpu.dot_dimension_numbers<[1], [0], [0], [1], [0, 0, 1, 1], [], []>} : vector<8x16xf32>, vector<16x10xf32>, vector<8x10xf32> -> vector<8x10xf32>
    %c0_15 = arith.constant 0 : index
    %c0_16 = arith.constant 0 : index
    %17 = vector.load %arg7[%c0_15, %c0_16] : memref<1x10xf32, #tpu.memory_space<vmem>>, vector<1x10xf32>
    %18 = vector.broadcast %17 : vector<1x10xf32> to vector<8x10xf32>
    %19 = arith.addf %16, %18 : vector<8x10xf32>
    %cst_17 = arith.constant dense<0xFF800000> : vector<8xf32>
    %20 = vector.multi_reduction <maximumf>, %19, %cst_17 [1] : vector<8x10xf32> to vector<8xf32>
    %21 = vector.shape_cast %20 : vector<8xf32> to vector<8x1xf32>
    %22 = vector.broadcast %21 : vector<8x1xf32> to vector<8x10xf32>
    %23 = arith.subf %19, %22 : vector<8x10xf32>
    %24 = math.exp %23 : vector<8x10xf32>
    %cst_18 = arith.constant dense<0.000000e+00> : vector<8xf32>
    %25 = vector.multi_reduction <add>, %24, %cst_18 [1] : vector<8x10xf32> to vector<8xf32>
    %26 = vector.shape_cast %25 : vector<8xf32> to vector<8x1xf32>
    %27 = math.log %26 : vector<8x1xf32>
    %28 = vector.broadcast %27 : vector<8x1xf32> to vector<8x10xf32>
    %29 = arith.subf %23, %28 : vector<8x10xf32>
    %c0_19 = arith.constant 0 : index
    %c0_20 = arith.constant 0 : index
    %30 = vector.load %arg8[%c0_19, %c0_20] : memref<8x10xf32, #tpu.memory_space<vmem>>, vector<8x10xf32>
    tpu.vector_store %arg8[%c0_19, %c0_20], %29 {strides = array<i32>} : memref<8x10xf32, #tpu.memory_space<vmem>>, vector<8x10xf32>,
    return
  }
  func.func @transform_0(%arg0: i32) -> (i32, i32) {
    %c0_i32 = arith.constant 0 : i32
    %c0_i32_0 = arith.constant 0 : i32
    return %arg0, %c0_i32 : i32, i32
  }
  func.func @transform_1(%arg0: i32) -> (i32, i32) {
    %c0_i32 = arith.constant 0 : i32
    %c0_i32_0 = arith.constant 0 : i32
    %c0_i32_1 = arith.constant 0 : i32
    return %c0_i32, %c0_i32_0 : i32, i32
  }
  func.func @transform_2(%arg0: i32) -> (i32, i32) {
    %c0_i32 = arith.constant 0 : i32
    %c0_i32_0 = arith.constant 0 : i32
    %c0_i32_1 = arith.constant 0 : i32
    return %c0_i32, %c0_i32_0 : i32, i32
  }
  func.func @transform_3(%arg0: i32) -> (i32, i32) {
    %c0_i32 = arith.constant 0 : i32
    %c0_i32_0 = arith.constant 0 : i32
    %c0_i32_1 = arith.constant 0 : i32
    return %c0_i32, %c0_i32_0 : i32, i32
  }
  func.func @transform_4(%arg0: i32) -> (i32, i32) {
    %c0_i32 = arith.constant 0 : i32
    %c0_i32_0 = arith.constant 0 : i32
    %c0_i32_1 = arith.constant 0 : i32
    return %c0_i32, %c0_i32_0 : i32, i32
  }
  func.func @transform_5(%arg0: i32) -> (i32, i32) {
    %c0_i32 = arith.constant 0 : i32
    %c0_i32_0 = arith.constant 0 : i32
    %c0_i32_1 = arith.constant 0 : i32
    return %c0_i32, %c0_i32_0 : i32, i32
  }
  func.func @transform_6(%arg0: i32) -> (i32, i32) {
    %c0_i32 = arith.constant 0 : i32
    %c0_i32_0 = arith.constant 0 : i32
    %c0_i32_1 = arith.constant 0 : i32
    return %c0_i32, %c0_i32_0 : i32, i32
  }
  func.func @transform_7(%arg0: i32) -> (i32, i32) {
    %c0_i32 = arith.constant 0 : i32
    %c0_i32_0 = arith.constant 0 : i32
    return %arg0, %c0_i32 : i32, i32
  }
}

</mosaic_0001>

<llo_original>
// kernel: mlp_forward.1
$region0: #{mlp_forward.1}
  #allocation0 [shape = 'u32[]', space=smem, size = 0x4, offset = 0x4, fixed_abs, tag = 'smem constant byte address 0x4 - core index']
  #allocation1 [shape = 'u32[72,128]{1,0:T(1,128)}', space=vmem, size = 0x9000, scoped, tag = 'internal scratch']
  %s0 = inlined_call_operand.vmem [shape: f32[8,784], index: 0, kind: input, shape index: {}]
  %s1 = inlined_call_operand.vmem [shape: f32[784,16], index: 1, kind: input, shape index: {}]
  %s2 = inlined_call_operand.vmem [shape: f32[1,16], index: 2, kind: input, shape index: {}]
  %s3 = inlined_call_operand.vmem [shape: f32[16,16], index: 3, kind: input, shape index: {}]
  %s4 = inlined_call_operand.vmem [shape: f32[1,16], index: 4, kind: input, shape index: {}]
  %s5 = inlined_call_operand.vmem [shape: f32[16,10], index: 5, kind: input, shape index: {}]
  %s6 = inlined_call_operand.vmem [shape: f32[1,10], index: 6, kind: input, shape index: {}]
  %s7 = inlined_call_operand.hbm [shape: f32[8,10], index: 7, kind: output, shape index: {}]
  %s8 = sld [smem:[#allocation0]]
  $region38: #{mlp_forward.1} parent=0
    _
  %s10 = ssub.s32 1, %s8
  %s11 = scalar_select 0, %s10, %s8
  $region1: #{mlp_forward.1} parent=0
    #allocation2 [shape = 'u8[4096]{0}', space=vmem, size = 0x1000, scoped, tag = 'output window, operand 0, single buffered']
    #allocation3 [shape = 's32[1]{0}', space=sflag, size = 0x4, scoped, tag = 'scoped memory for mlp_forward.1']
    %12 = vsyncpa [#allocation3], 0
    // Predicated region
    $region2: #{mlp_forward.1} parent=1 // pred_check
      _
    $region3: #{mlp_forward.1} parent=1 // pred_check_branch
      %14 = sbr.rel (0) target = $region5
    $region4: #{mlp_forward.1} parent=1 // pred_region
      _
    $region5: #{mlp_forward.1} parent=1 // pred_fallthru
      _
    // Predicated region
    $region6: #{mlp_forward.1} parent=1 // pred_check
      _
    $region7: #{mlp_forward.1} parent=1 // pred_check_branch
      %16 = sbr.rel (0) target = $region9
    $region8: #{mlp_forward.1} parent=1 // pred_region
      _
    $region9: #{mlp_forward.1} parent=1 // pred_fallthru
      _
    // Predicated region
    $region10: #{mlp_forward.1} parent=1 // pred_check
      _
    $region11: #{mlp_forward.1} parent=1 // pred_check_branch
      %18 = sbr.rel (0) target = $region13
    $region12: #{mlp_forward.1} parent=1 // pred_region
      _
    $region13: #{mlp_forward.1} parent=1 // pred_fallthru
      _
    // Predicated region
    $region14: #{mlp_forward.1} parent=1 // pred_check
      _
    $region15: #{mlp_forward.1} parent=1 // pred_check_branch
      %20 = sbr.rel (0) target = $region17
    $region16: #{mlp_forward.1} parent=1 // pred_region
      _
    $region17: #{mlp_forward.1} parent=1 // pred_fallthru
      _
    // Predicated region
    $region18: #{mlp_forward.1} parent=1 // pred_check
      _
    $region19: #{mlp_forward.1} parent=1 // pred_check_branch
      %22 = sbr.rel (0) target = $region21
    $region20: #{mlp_forward.1} parent=1 // pred_region
      _
    $region21: #{mlp_forward.1} parent=1 // pred_fallthru
      _
    // Predicated region
    $region22: #{mlp_forward.1} parent=1 // pred_check
      _
    $region23: #{mlp_forward.1} parent=1 // pred_check_branch
      %24 = sbr.rel (0) target = $region25
    $region24: #{mlp_forward.1} parent=1 // pred_region
      _
    $region25: #{mlp_forward.1} parent=1 // pred_fallthru
      _
    // Predicated region
    $region26: #{mlp_forward.1} parent=1 // pred_check
      _
    $region27: #{mlp_forward.1} parent=1 // pred_check_branch
      %26 = sbr.rel (0) target = $region29
    $region28: #{mlp_forward.1} parent=1 // pred_region
      _
    $region29: #{mlp_forward.1} parent=1 // pred_fallthru
      _
    %v27 = vld [vmem:[%s0] sm:$0xff]
    %v28 = vld [vmem:[%s0 + $0x8] sm:$0xff]
    %v29 = vld [vmem:[%s0 + $0x10] sm:$0xff]
    %v30 = vld [vmem:[%s0 + $0x18] sm:$0xff]
    %v31 = vld [vmem:[%s0 + $0x20] sm:$0xff]
    %v32 = vld [vmem:[%s0 + $0x28] sm:$0xff]
    %v33 = vld [vmem:[%s0 + $0x30] sm:$0xff]
    %v34 = vld [vmem:[%s1] sm:$0xff]
    %v35 = vld [vmem:[%s1 + $0x8] sm:$0xff]
    %v36 = vld [vmem:[%s1 + $0x10] sm:$0xff]
    %v37 = vld [vmem:[%s1 + $0x18] sm:$0xff]
    %v38 = vld [vmem:[%s1 + $0x20] sm:$0xff]
    %v39 = vld [vmem:[%s1 + $0x28] sm:$0xff]
    %v40 = vld [vmem:[%s1 + $0x30] sm:$0xff]
    %v41 = vld [vmem:[%s1 + $0x38] sm:$0xff]
    %v42 = vld [vmem:[%s1 + $0x40] sm:$0xff]
    %v43 = vld [vmem:[%s1 + $0x48] sm:$0xff]
    %v44 = vld [vmem:[%s1 + $0x50] sm:$0xff]
    %v45 = vld [vmem:[%s1 + $0x58] sm:$0xff]
    %v46 = vld [vmem:[%s1 + $0x60] sm:$0xff]
    %v47 = vld [vmem:[%s1 + $0x68] sm:$0xff]
    %v48 = vld [vmem:[%s1 + $0x70] sm:$0xff]
    %v49 = vld [vmem:[%s1 + $0x78] sm:$0xff]
    %v50 = vld [vmem:[%s1 + $0x80] sm:$0xff]
    %v51 = vld [vmem:[%s1 + $0x88] sm:$0xff]
    %v52 = vld [vmem:[%s1 + $0x90] sm:$0xff]
    %v53 = vld [vmem:[%s1 + $0x98] sm:$0xff]
    %v54 = vld [vmem:[%s1 + $0xa0] sm:$0xff]
    %v55 = vld [vmem:[%s1 + $0xa8] sm:$0xff]
    %v56 = vld [vmem:[%s1 + $0xb0] sm:$0xff]
    %v57 = vld [vmem:[%s1 + $0xb8] sm:$0xff]
    %v58 = vld [vmem:[%s1 + $0xc0] sm:$0xff]
    %v59 = vld [vmem:[%s1 + $0xc8] sm:$0xff]
    %v60 = vld [vmem:[%s1 + $0xd0] sm:$0xff]
    %v61 = vld [vmem:[%s1 + $0xd8] sm:$0xff]
    %v62 = vld [vmem:[%s1 + $0xe0] sm:$0xff]
    %v63 = vld [vmem:[%s1 + $0xe8] sm:$0xff]
    %v64 = vld [vmem:[%s1 + $0xf0] sm:$0xff]
    %v65 = vld [vmem:[%s1 + $0xf8] sm:$0xff]
    %v66 = vld [vmem:[%s1 + $0x100] sm:$0xff]
    %v67 = vld [vmem:[%s1 + $0x108] sm:$0xff]
    %v68 = vld [vmem:[%s1 + $0x110] sm:$0xff]
    %v69 = vld [vmem:[%s1 + $0x118] sm:$0xff]
    %v70 = vld [vmem:[%s1 + $0x120] sm:$0xff]
    %v71 = vld [vmem:[%s1 + $0x128] sm:$0xff]
    %v72 = vld [vmem:[%s1 + $0x130] sm:$0xff]
    %v73 = vld [vmem:[%s1 + $0x138] sm:$0xff]
    %v74 = vld [vmem:[%s1 + $0x140] sm:$0xff]
    %v75 = vld [vmem:[%s1 + $0x148] sm:$0xff]
    %v76 = vld [vmem:[%s1 + $0x150] sm:$0xff]
    %v77 = vld [vmem:[%s1 + $0x158] sm:$0xff]
    %v78 = vld [vmem:[%s1 + $0x160] sm:$0xff]
    %v79 = vld [vmem:[%s1 + $0x168] sm:$0xff]
    %v80 = vld [vmem:[%s1 + $0x170] sm:$0xff]
    %v81 = vld [vmem:[%s1 + $0x178] sm:$0xff]
    %v82 = vld [vmem:[%s1 + $0x180] sm:$0xff]
    %v83 = vld [vmem:[%s1 + $0x188] sm:$0xff]
    %v84 = vld [vmem:[%s1 + $0x190] sm:$0xff]
    %v85 = vld [vmem:[%s1 + $0x198] sm:$0xff]
    %v86 = vld [vmem:[%s1 + $0x1a0] sm:$0xff]
    %v87 = vld [vmem:[%s1 + $0x1a8] sm:$0xff]
    %v88 = vld [vmem:[%s1 + $0x1b0] sm:$0xff]
    %v89 = vld [vmem:[%s1 + $0x1b8] sm:$0xff]
    %v90 = vld [vmem:[%s1 + $0x1c0] sm:$0xff]
    %v91 = vld [vmem:[%s1 + $0x1c8] sm:$0xff]
    %v92 = vld [vmem:[%s1 + $0x1d0] sm:$0xff]
    %v93 = vld [vmem:[%s1 + $0x1d8] sm:$0xff]
    %v94 = vld [vmem:[%s1 + $0x1e0] sm:$0xff]
    %v95 = vld [vmem:[%s1 + $0x1e8] sm:$0xff]
    %v96 = vld [vmem:[%s1 + $0x1f0] sm:$0xff]
    %v97 = vld [vmem:[%s1 + $0x1f8] sm:$0xff]
    %v98 = vld [vmem:[%s1 + $0x200] sm:$0xff]
    %v99 = vld [vmem:[%s1 + $0x208] sm:$0xff]
    %v100 = vld [vmem:[%s1 + $0x210] sm:$0xff]
    %v101 = vld [vmem:[%s1 + $0x218] sm:$0xff]
    %v102 = vld [vmem:[%s1 + $0x220] sm:$0xff]
    %v103 = vld [vmem:[%s1 + $0x228] sm:$0xff]
    %v104 = vld [vmem:[%s1 + $0x230] sm:$0xff]
    %v105 = vld [vmem:[%s1 + $0x238] sm:$0xff]
    %v106 = vld [vmem:[%s1 + $0x240] sm:$0xff]
    %v107 = vld [vmem:[%s1 + $0x248] sm:$0xff]
    %v108 = vld [vmem:[%s1 + $0x250] sm:$0xff]
    %v109 = vld [vmem:[%s1 + $0x258] sm:$0xff]
    %v110 = vld [vmem:[%s1 + $0x260] sm:$0xff]
    %v111 = vld [vmem:[%s1 + $0x268] sm:$0xff]
    %v112 = vld [vmem:[%s1 + $0x270] sm:$0xff]
    %v113 = vld [vmem:[%s1 + $0x278] sm:$0xff]
    %v114 = vld [vmem:[%s1 + $0x280] sm:$0xff]
    %v115 = vld [vmem:[%s1 + $0x288] sm:$0xff]
    %v116 = vld [vmem:[%s1 + $0x290] sm:$0xff]
    %v117 = vld [vmem:[%s1 + $0x298] sm:$0xff]
    %v118 = vld [vmem:[%s1 + $0x2a0] sm:$0xff]
    %v119 = vld [vmem:[%s1 + $0x2a8] sm:$0xff]
    %v120 = vld [vmem:[%s1 + $0x2b0] sm:$0xff]
    %v121 = vld [vmem:[%s1 + $0x2b8] sm:$0xff]
    %v122 = vld [vmem:[%s1 + $0x2c0] sm:$0xff]
    %v123 = vld [vmem:[%s1 + $0x2c8] sm:$0xff]
    %v124 = vld [vmem:[%s1 + $0x2d0] sm:$0xff]
    %v125 = vld [vmem:[%s1 + $0x2d8] sm:$0xff]
    %v126 = vld [vmem:[%s1 + $0x2e0] sm:$0xff]
    %v127 = vld [vmem:[%s1 + $0x2e8] sm:$0xff]
    %v128 = vld [vmem:[%s1 + $0x2f0] sm:$0xff]
    %v129 = vld [vmem:[%s1 + $0x2f8] sm:$0xff]
    %v130 = vld [vmem:[%s1 + $0x300] sm:$0xff]
    %v131 = vld [vmem:[%s1 + $0x308] sm:$0xff]
    %v132 = vld [vmem:[%s2] sm:$0x1]
    %v134 = vperm.slane %v132, 0
    %vm136 = vcmask 130048
    %v138 = vsel %vm136, %v33, 0
    %140 = vmatpush.msra.mxu0 %v49
    %141 = vmatpush.msra.mxu0 %v48
    %142 = vmatpush.msra.mxu0 %v47
    %143 = vmatpush.msra.mxu0 %v46
    %144 = vmatpush.msra.mxu0 %v45
    %145 = vmatpush.msra.mxu0 %v44
    %146 = vmatpush.msra.mxu0 %v43
    %147 = vmatpush.msra.mxu0 %v42
    %148 = vmatpush.msra.mxu0 %v41
    %149 = vmatpush.msra.mxu0 %v40
    %150 = vmatpush.msra.mxu0 %v39
    %151 = vmatpush.msra.mxu0 %v38
    %152 = vmatpush.msra.mxu0 %v37
    %153 = vmatpush.msra.mxu0 %v36
    %154 = vmatpush.msra.mxu0 %v35
    %155 = vmatpush.msra.mxu0 %v34
    %156 = vmatmul.f32.gmra.mxu0 %v27
    %v157 = vpop.f32.mrf.mxu0
    %v158 = vadd.f32 %v134, %v157
    %159 = vdwg.mxu0
    %160 = vmatpush.msra.mxu0 %v65
    %161 = vmatpush.msra.mxu0 %v64
    %162 = vmatpush.msra.mxu0 %v63
    %163 = vmatpush.msra.mxu0 %v62
    %164 = vmatpush.msra.mxu0 %v61
    %165 = vmatpush.msra.mxu0 %v60
    %166 = vmatpush.msra.mxu0 %v59
    %167 = vmatpush.msra.mxu0 %v58
    %168 = vmatpush.msra.mxu0 %v57
    %169 = vmatpush.msra.mxu0 %v56
    %170 = vmatpush.msra.mxu0 %v55
    %171 = vmatpush.msra.mxu0 %v54
    %172 = vmatpush.msra.mxu0 %v53
    %173 = vmatpush.msra.mxu0 %v52
    %174 = vmatpush.msra.mxu0 %v51
    %175 = vmatpush.msra.mxu0 %v50
    %176 = vmatmul.f32.gmra.mxu0 %v28
    %v177 = vpop.f32.mrf.mxu0
    %v178 = vadd.f32 %v158, %v177
    %179 = vdwg.mxu0
    %180 = vmatpush.msra.mxu0 %v81
    %181 = vmatpush.msra.mxu0 %v80
    %182 = vmatpush.msra.mxu0 %v79
    %183 = vmatpush.msra.mxu0 %v78
    %184 = vmatpush.msra.mxu0 %v77
    %185 = vmatpush.msra.mxu0 %v76
    %186 = vmatpush.msra.mxu0 %v75
    %187 = vmatpush.msra.mxu0 %v74
    %188 = vmatpush.msra.mxu0 %v73
    %189 = vmatpush.msra.mxu0 %v72
    %190 = vmatpush.msra.mxu0 %v71
    %191 = vmatpush.msra.mxu0 %v70
    %192 = vmatpush.msra.mxu0 %v69
    %193 = vmatpush.msra.mxu0 %v68
    %194 = vmatpush.msra.mxu0 %v67
    %195 = vmatpush.msra.mxu0 %v66
    %196 = vmatmul.f32.gmra.mxu0 %v29
    %v197 = vpop.f32.mrf.mxu0
    %v198 = vadd.f32 %v178, %v197
    %199 = vdwg.mxu0
    %200 = vmatpush.msra.mxu0 %v97
    %201 = vmatpush.msra.mxu0 %v96
    %202 = vmatpush.msra.mxu0 %v95
    %203 = vmatpush.msra.mxu0 %v94
    %204 = vmatpush.msra.mxu0 %v93
    %205 = vmatpush.msra.mxu0 %v92
    %206 = vmatpush.msra.mxu0 %v91
    %207 = vmatpush.msra.mxu0 %v90
    %208 = vmatpush.msra.mxu0 %v89
    %209 = vmatpush.msra.mxu0 %v88
    %210 = vmatpush.msra.mxu0 %v87
    %211 = vmatpush.msra.mxu0 %v86
    %212 = vmatpush.msra.mxu0 %v85
    %213 = vmatpush.msra.mxu0 %v84
    %214 = vmatpush.msra.mxu0 %v83
    %215 = vmatpush.msra.mxu0 %v82
    %216 = vmatmul.f32.gmra.mxu0 %v30
    %v217 = vpop.f32.mrf.mxu0
    %v218 = vadd.f32 %v198, %v217
    %219 = vdwg.mxu0
    %220 = vmatpush.msra.mxu0 %v113
    %221 = vmatpush.msra.mxu0 %v112
    %222 = vmatpush.msra.mxu0 %v111
    %223 = vmatpush.msra.mxu0 %v110
    %224 = vmatpush.msra.mxu0 %v109
    %225 = vmatpush.msra.mxu0 %v108
    %226 = vmatpush.msra.mxu0 %v107
    %227 = vmatpush.msra.mxu0 %v106
    %228 = vmatpush.msra.mxu0 %v105
    %229 = vmatpush.msra.mxu0 %v104
    %230 = vmatpush.msra.mxu0 %v103
    %231 = vmatpush.msra.mxu0 %v102
    %232 = vmatpush.msra.mxu0 %v101
    %233 = vmatpush.msra.mxu0 %v100
    %234 = vmatpush.msra.mxu0 %v99
    %235 = vmatpush.msra.mxu0 %v98
    %236 = vmatmul.f32.gmra.mxu0 %v31
    %v237 = vpop.f32.mrf.mxu0
    %v238 = vadd.f32 %v218, %v237
    %239 = vdwg.mxu0
    %240 = vmatpush.msra.mxu0 %v129
    %241 = vmatpush.msra.mxu0 %v128
    %242 = vmatpush.msra.mxu0 %v127
    %243 = vmatpush.msra.mxu0 %v126
    %244 = vmatpush.msra.mxu0 %v125
    %245 = vmatpush.msra.mxu0 %v124
    %246 = vmatpush.msra.mxu0 %v123
    %247 = vmatpush.msra.mxu0 %v122
    %248 = vmatpush.msra.mxu0 %v121
    %249 = vmatpush.msra.mxu0 %v120
    %250 = vmatpush.msra.mxu0 %v119
    %251 = vmatpush.msra.mxu0 %v118
    %252 = vmatpush.msra.mxu0 %v117
    %253 = vmatpush.msra.mxu0 %v116
    %254 = vmatpush.msra.mxu0 %v115
    %255 = vmatpush.msra.mxu0 %v114
    %256 = vmatmul.f32.gmra.mxu0 %v32
    %v257 = vpop.f32.mrf.mxu0
    %v258 = vadd.f32 %v238, %v257
    %259 = vdwg.mxu0
    %260 = vmatpush.msra.mxu0 0.0
    %261 = vmatpush.msra.mxu0 0.0
    %262 = vmatpush.msra.mxu0 0.0
    %263 = vmatpush.msra.mxu0 0.0
    %264 = vmatpush.msra.mxu0 0.0
    %265 = vmatpush.msra.mxu0 0.0
    %266 = vmatpush.msra.mxu0 0.0
    %267 = vmatpush.msra.mxu0 0.0
    %268 = vmatpush.msra.mxu0 0.0
    %269 = vmatpush.msra.mxu0 0.0
    %270 = vmatpush.msra.mxu0 0.0
    %271 = vmatpush.msra.mxu0 0.0
    %272 = vmatpush.msra.mxu0 0.0
    %273 = vmatpush.msra.mxu0 0.0
    %274 = vmatpush.msra.mxu0 %v131
    %275 = vmatpush.msra.mxu0 %v130
    %276 = vmatmul.f32.gmra.mxu0 %v138
    %v277 = vpop.f32.mrf.mxu0
    %v278 = vadd.f32 %v258, %v277
    %279 = vdwg.mxu0
    %v280 = vmax.f32 %v278, 0.0
    %v281 = vld [vmem:[%s3] sm:$0xff]
    %v282 = vld [vmem:[%s3 + $0x8] sm:$0xff]
    %v283 = vld [vmem:[%s4] sm:$0x1]
    %v285 = vperm.slane %v283, 0
    %v288 = vsel %vm136, %v280, 0
    %290 = vmatpush.msra.mxu0 0.0
    %291 = vmatpush.msra.mxu0 0.0
    %292 = vmatpush.msra.mxu0 0.0
    %293 = vmatpush.msra.mxu0 0.0
    %294 = vmatpush.msra.mxu0 0.0
    %295 = vmatpush.msra.mxu0 0.0
    %296 = vmatpush.msra.mxu0 0.0
    %297 = vmatpush.msra.mxu0 0.0
    %298 = vmatpush.msra.mxu0 0.0
    %299 = vmatpush.msra.mxu0 0.0
    %300 = vmatpush.msra.mxu0 0.0
    %301 = vmatpush.msra.mxu0 0.0
    %302 = vmatpush.msra.mxu0 0.0
    %303 = vmatpush.msra.mxu0 0.0
    %304 = vmatpush.msra.mxu0 %v282
    %305 = vmatpush.msra.mxu0 %v281
    %306 = vmatmul.f32.gmra.mxu0 %v288
    %v307 = vpop.f32.mrf.mxu0
    %v308 = vadd.f32 %v285, %v307
    %309 = vdwg.mxu0
    %v310 = vmax.f32 %v308, 0.0
    %v311 = vld [vmem:[%s5] sm:$0xff]
    %v312 = vld [vmem:[%s5 + $0x8] sm:$0xff]
    %v313 = vld [vmem:[%s6] sm:$0x1]
    %v315 = vperm.slane %v313, 0
    %v318 = vsel %vm136, %v310, 0
    %320 = vmatpush.msra.mxu0 0.0
    %321 = vmatpush.msra.mxu0 0.0
    %322 = vmatpush.msra.mxu0 0.0
    %323 = vmatpush.msra.mxu0 0.0
    %324 = vmatpush.msra.mxu0 0.0
    %325 = vmatpush.msra.mxu0 0.0
    %326 = vmatpush.msra.mxu0 0.0
    %327 = vmatpush.msra.mxu0 0.0
    %328 = vmatpush.msra.mxu0 0.0
    %329 = vmatpush.msra.mxu0 0.0
    %330 = vmatpush.msra.mxu0 0.0
    %331 = vmatpush.msra.mxu0 0.0
    %332 = vmatpush.msra.mxu0 0.0
    %333 = vmatpush.msra.mxu0 0.0
    %334 = vmatpush.msra.mxu0 %v312
    %335 = vmatpush.msra.mxu0 %v311
    %336 = vmatmul.f32.gmra.mxu0 %v318
    %v337 = vpop.f32.mrf.mxu0
    %v338 = vadd.f32 %v315, %v337
    %339 = vdwg.mxu0
    %vm340 = vcmask 80896
    %v341 = vsel %vm340, %v338, -inf
    %342 = vmax.xlane.f32.xlu0 %v341
    %v343 = vpop.xlane.xlu0 %342
    %v344 = vsub.f32 %v338, %v343
    %v345 = vmul.f32 %v344, 1.442695
    %v346 = vpow.pop %v345
    %v347 = vsel %vm340, %v346, 0.0
    %348 = vadd.xlane.f32.xlu0 %v347
    %v349 = vpop.xlane.xlu0 %348
    %v350 = vlog2.pop %v349
    %v351 = vmul.f32 %v350, 0.6931472
    %v352 = vsub.f32 %v344, %v351
    %353 = vst.msk [vmem:[#allocation2] sm:$0xff] %vm340, %v352
    // Predicated region
    $region30: #{mlp_forward.1} parent=1 // pred_check
      _
    $region31: #{mlp_forward.1} parent=1 // pred_check_branch
      %355 = sbr.rel (0) target = $region33
    $region32: #{mlp_forward.1} parent=1 // pred_region
      %357 = vsyncadd [#allocation3], 0
      %s359 = sshll.u32 [#allocation2], 4
      %s360 = int_to_ptr.vmem [resolvable:$true] %s359
      %s361 = sshll.u32 %s7, 4
      %s362 = int_to_ptr.hbm [resolvable:$true] %s361
      %364 = dma.vmem_to_hbm [thread:$0]  %s360, 128, %s362, [#allocation3]
    $region33: #{mlp_forward.1} parent=1 // pred_fallthru
      _
    // Predicated region
    $region34: #{mlp_forward.1} parent=1 // pred_check
      _
    $region35: #{mlp_forward.1} parent=1 // pred_check_branch
      %366 = sbr.rel (0) target = $region37
    $region36: #{mlp_forward.1} parent=1 // pred_region
      %368 = dma.done [#allocation3], 128
    $region37: #{mlp_forward.1} parent=1 // pred_fallthru
      _
    %369 = vsyncpa [#allocation3], 1

</llo_original>
